<compile_context>
chip_gen: v7x
topology: tpu7x:2x2x1
jax: 0.10.0
libtpu: 0.0.40
codegen_flags: <defaults>
</compile_context>

<pallas_src>
import functools

import jax
import jax.numpy as jnp
from jax.experimental import pallas as pl
from jax.experimental.pallas import tpu as pltpu


# ---------------------------------------------------------------------------
# helpers
# ---------------------------------------------------------------------------

def _choose_tl(L, V, halo):
    """Largest frame tile TL dividing L whose block lane width TL*V is 128-aligned."""
    for t in range(min(L, 128), 0, -1):
        if L % t == 0 and t >= halo and (t * V) % 128 == 0:
            return t
    return L  # whole-sequence blocks (always legal: equals full extent)


# ---------------------------------------------------------------------------
# Pallas kernels
# ---------------------------------------------------------------------------

def _layer_kernel(x_ref, a_ref, w_ref, beff_ref, g_ref, b_ref, *rest,
                  cin, cout, nparts, njoints, tl, taps, stride, res_mode, eps):
    """Fused OfflineLayer: graph aggregation + 1x1 conv (partition-stacked K)
    + temporal Toeplitz band + LayerNorm/ReLU + residual (+LN) + add/ReLU."""
    if res_mode == 'conv':
        wr_ref, rg_ref, rb_ref = rest[0], rest[1], rest[2]
        rest = rest[3:]
    o_ref = rest[0]
    gbuf = rest[1]
    ext = rest[2] if taps > 1 else None
    halo = (taps - 1) * stride
    V = njoints

    x2 = x_ref[0]                                      # (cin, TL*V), lane-dense
    x_tv = x2.reshape(cin * tl, V)                     # rows (cin, t), lanes v

    # ---- spatial graph aggregation; partitions stacked along the K axis ----
    for p in range(nparts):                            # nparts is small & static
        gp = jnp.dot(x_tv, a_ref[p], preferred_element_type=jnp.float32)
        gbuf[p * cin:(p + 1) * cin, :] = gp.reshape(cin, tl * V)

    # ---- 1x1 conv folded with the partition sum: one K = P*Cin matmul ----
    y2 = jnp.dot(w_ref[...], gbuf[...], preferred_element_type=jnp.float32)
    y3 = y2.reshape(cout, tl, V) + beff_ref[...]       # graph-aggregated conv bias

    # ---- temporal (Toeplitz band) accumulation with cross-tile carry ----
    if taps > 1:
        @pl.when(pl.program_id(1) == 0)
        def _():
            ext[:, 0:halo, :] = jnp.zeros((cout, halo, V), jnp.float32)

        ext[:, halo:halo + tl, :] = y3
        carry = ext[:, tl:tl + halo, :]                # last `halo` frames, next tile
        acc = y3
        for i in range(1, taps):
            off = halo - i * stride
            acc = acc + ext[:, off:off + tl, :]
        ext[:, 0:halo, :] = carry
        y3 = acc

    # ---- LayerNorm over (C, V) per frame + ReLU ----
    m = jnp.mean(jnp.mean(y3, axis=2, keepdims=True), axis=0, keepdims=True)
    d = y3 - m
    var = jnp.mean(jnp.mean(d * d, axis=2, keepdims=True), axis=0, keepdims=True)
    yn = d * jax.lax.rsqrt(var + eps)
    yn = jnp.maximum(yn * g_ref[...] + b_ref[...], 0.0)

    # ---- residual branch + final activation ----
    # TODO(synk): Dropout is a no-op here (inference / eval semantics).
    if res_mode == 'id':
        out3 = jnp.maximum(yn + x2.reshape(cout, tl, V), 0.0)
    elif res_mode == 'conv':
        r3 = jnp.dot(wr_ref[...], x2,
                     preferred_element_type=jnp.float32).reshape(cout, tl, V)
        rm = jnp.mean(jnp.mean(r3, axis=2, keepdims=True), axis=0, keepdims=True)
        rd = r3 - rm
        rv = jnp.mean(jnp.mean(rd * rd, axis=2, keepdims=True),
                      axis=0, keepdims=True)
        rn = rd * jax.lax.rsqrt(rv + eps) * rg_ref[...] + rb_ref[...]
        out3 = jnp.maximum(yn + rn, 0.0)
    else:
        out3 = yn

    o_ref[0] = out3.reshape(cout, tl * V)              # lane-dense store


def _stem_kernel(x_ref, g_ref, b_ref, w_ref, bias_ref, o_ref, *,
                 c0, njoints, tl, eps):
    """norm_in (LayerNorm over (C,V) per frame) fused with fcn_in (1x1 conv)."""
    V = njoints
    x3 = x_ref[0].reshape(c0, tl, V)
    m = jnp.mean(jnp.mean(x3, axis=2, keepdims=True), axis=0, keepdims=True)
    d = x3 - m
    var = jnp.mean(jnp.mean(d * d, axis=2, keepdims=True), axis=0, keepdims=True)
    xn = d * jax.lax.rsqrt(var + eps) * g_ref[...] + b_ref[...]
    y = jnp.dot(w_ref[...], xn.reshape(c0, tl * V),
                preferred_element_type=jnp.float32) + bias_ref[...]
    o_ref[0] = y


def _head_kernel(x_ref, w_ref, b_ref, o_ref, *, cf, njoints, length):
    """AvgPool2d((1, V)) fused with the 1x1 classifier conv (+ squeeze(-1))."""
    x3 = x_ref[0].reshape(cf, length, njoints)
    xm = jnp.mean(x3, axis=2)                          # (C, L)
    o_ref[0] = jnp.dot(w_ref[...], xm,
                       preferred_element_type=jnp.float32) + b_ref[...]


# ---------------------------------------------------------------------------
# pallas_call wrappers
# ---------------------------------------------------------------------------

_VMEM_LIMIT = 32 * 1024 * 1024   # explicit scoped-VMEM budget (safe on v5e/v6e/v7x)


def stem(x, gamma, beta, w, bias, V, eps=1e-5):
    """x: (N, C0, L*V) -> (N, C1, L*V)."""
    N, C0, LV = x.shape
    L = LV // V
    C1 = w.shape[0]
    TL = _choose_tl(L, V, 1)
    kern = functools.partial(_stem_kernel, c0=C0, njoints=V, tl=TL, eps=eps)
    return pl.pallas_call(
        kern,
        out_shape=jax.ShapeDtypeStruct((N, C1, LV), jnp.float32),
        grid=(N, L // TL),
        in_specs=[pl.BlockSpec((1, C0, TL * V), lambda n, lt: (n, 0, lt)),
                  pl.BlockSpec((C0, 1, V), lambda n, lt: (0, 0, 0)),
                  pl.BlockSpec((C0, 1, V), lambda n, lt: (0, 0, 0)),
                  pl.BlockSpec((C1, C0), lambda n, lt: (0, 0)),
                  pl.BlockSpec((C1, 1), lambda n, lt: (0, 0))],
        out_specs=pl.BlockSpec((1, C1, TL * V), lambda n, lt: (n, 0, lt)),
        compiler_params=pltpu.CompilerParams(
            dimension_semantics=("parallel", "parallel"),
            vmem_limit_bytes=_VMEM_LIMIT),
    )(x, gamma.reshape(C0, 1, V), beta.reshape(C0, 1, V), w, bias.reshape(C1, 1))


def offline_layer(x, lw, cin, cout, stride, residual, A, kernel_size, V):
    """One fused OfflineLayer.  x: (N, cin, L*V) -> (N, cout, L*V)."""
    N, _, LV = x.shape
    L = LV // V
    P = A.shape[0]
    taps = max(kernel_size // stride, 1)
    halo = (taps - 1) * stride
    TL = _choose_tl(L, V, max(halo, 1))

    # --- fold / pre-transpose parameters once outside the kernel ---
    A_eff = A * lw['edge_importance']                              # (P, V, V)
    wcat = (lw['conv_w'].reshape(P, cout, cin)
            .transpose(1, 0, 2).reshape(cout, P * cin))            # (cout, P*cin)
    colsum = jnp.sum(A_eff, axis=1)                                # (P, V)
    beff = jnp.sum(lw['conv_b'].reshape(P, cout)[:, :, None]
                   * colsum[:, None, :], axis=0)                   # (cout, V)
    beff = beff.reshape(cout, 1, V)

    if residual and cin == cout and stride == 1:
        res_mode = 'id'
    elif residual:
        res_mode = 'conv'
    else:
        res_mode = 'none'

    in_specs = [
        pl.BlockSpec((1, cin, TL * V), lambda n, lt: (n, 0, lt)),
        pl.BlockSpec((P, V, V), lambda n, lt: (0, 0, 0)),
        pl.BlockSpec((cout, P * cin), lambda n, lt: (0, 0)),
        pl.BlockSpec((cout, 1, V), lambda n, lt: (0, 0, 0)),
        pl.BlockSpec((cout, 1, V), lambda n, lt: (0, 0, 0)),
        pl.BlockSpec((cout, 1, V), lambda n, lt: (0, 0, 0)),
    ]
    args = [x, A_eff, wcat, beff,
            lw['ln_g'].reshape(cout, 1, V), lw['ln_b'].reshape(cout, 1, V)]
    if res_mode == 'conv':
        in_specs += [pl.BlockSpec((cout, cin), lambda n, lt: (0, 0)),
                     pl.BlockSpec((cout, 1, V), lambda n, lt: (0, 0, 0)),
                     pl.BlockSpec((cout, 1, V), lambda n, lt: (0, 0, 0))]
        args += [lw['res_w'],
                 lw['res_ln_g'].reshape(cout, 1, V),
                 lw['res_ln_b'].reshape(cout, 1, V)]

    scratch = [pltpu.VMEM((P * cin, TL * V), jnp.float32)]
    if taps > 1:
        scratch.append(pltpu.VMEM((cout, halo + TL, V), jnp.float32))

    kern = functools.partial(_layer_kernel, cin=cin, cout=cout, nparts=P,
                             njoints=V, tl=TL, taps=taps, stride=stride,
                             res_mode=res_mode, eps=1e-5)
    return pl.pallas_call(
        kern,
        out_shape=jax.ShapeDtypeStruct((N, cout, LV), jnp.float32),
        grid=(N, L // TL),
        in_specs=in_specs,
        out_specs=pl.BlockSpec((1, cout, TL * V), lambda n, lt: (n, 0, lt)),
        scratch_shapes=scratch,
        compiler_params=pltpu.CompilerParams(
            dimension_semantics=("parallel", "arbitrary"),   # carry along L-tiles
            vmem_limit_bytes=_VMEM_LIMIT),
    )(*args)


def head(x, w, b, V):
    """AvgPool2d((1, V)) + 1x1 classifier conv + squeeze(-1).  x: (N, C, L*V)."""
    N, C, LV = x.shape
    L = LV // V
    K = w.shape[0]
    kern = functools.partial(_head_kernel, cf=C, njoints=V, length=L)
    return pl.pallas_call(
        kern,
        out_shape=jax.ShapeDtypeStruct((N, K, L), jnp.float32),
        grid=(N,),
        in_specs=[pl.BlockSpec((1, C, LV), lambda n: (n, 0, 0)),
                  pl.BlockSpec((K, C), lambda n: (0, 0)),
                  pl.BlockSpec((K, 1), lambda n: (0, 0))],
        out_specs=pl.BlockSpec((1, K, L), lambda n: (n, 0, 0)),
        compiler_params=pltpu.CompilerParams(
            dimension_semantics=("parallel",),
            vmem_limit_bytes=_VMEM_LIMIT),
    )(x, w, b.reshape(K, 1))


# ---------------------------------------------------------------------------
# Model assembly
# ---------------------------------------------------------------------------

def model_forward(x, params, cfg, A, V):
    """x: (N, in_feat, L*V) lane-dense layout -> (N, num_classes, L)."""
    x = stem(x, params['ln_in_g'], params['ln_in_b'],
             params['fcn_in_w'], params['fcn_in_b'], V)
    for i, lw in enumerate(params['layers']):
        x = offline_layer(x, lw, cfg['in_ch'][i], cfg['out_ch'][i],
                          cfg['stride'][i], cfg['residual'][i], A,
                          cfg['kernel'], V)
    return head(x, params['fcn_out_w'], params['fcn_out_b'], V)


# ---------------------------------------------------------------------------
# Deterministic parameter init (same layout as the PyTorch module)
# ---------------------------------------------------------------------------

def _conv_init(key, cout, cin, scale=0.1):
    kw, kb = jax.random.split(key)
    w = scale * jax.random.normal(kw, (cout, cin), jnp.float32)
    b = scale * jax.random.normal(kb, (cout,), jnp.float32)
    return w, b


def init_params(key, cfg, V, P):
    keys = jax.random.split(key, cfg['layers'] + 2)
    params = {}
    c0 = cfg['in_feat']
    params['ln_in_g'] = jnp.ones((c0, V), jnp.float32)
    params['ln_in_b'] = jnp.zeros((c0, V), jnp.float32)
    params['fcn_in_w'], params['fcn_in_b'] = _conv_init(keys[0], cfg['in_ch'][0], c0)

    layers = []
    for i in range(cfg['layers']):
        cin, cout = cfg['in_ch'][i], cfg['out_ch'][i]
        kc, kr = jax.random.split(keys[1 + i])
        lw = {}
        lw['conv_w'], lw['conv_b'] = _conv_init(kc, cout * P, cin)
        lw['edge_importance'] = (jnp.ones((P, V, V), jnp.float32)
                                 if cfg['importance'] else jnp.float32(1.0))
        lw['ln_g'] = jnp.ones((cout, V), jnp.float32)
        lw['ln_b'] = jnp.zeros((cout, V), jnp.float32)
        if cfg['residual'][i] and not (cin == cout and cfg['stride'][i] == 1):
            lw['res_w'], _ = _conv_init(kr, cout, cin)          # bias=False
            lw['res_ln_g'] = jnp.ones((cout, V), jnp.float32)
            lw['res_ln_b'] = jnp.zeros((cout, V), jnp.float32)
        layers.append(lw)
    params['layers'] = layers

    params['fcn_out_w'], params['fcn_out_b'] = _conv_init(
        keys[-1], cfg['num_classes'], cfg['out_ch'][-1])
    return params


# ---------------------------------------------------------------------------
# Pure-JAX reference (original op order: conv -> graph -> Toeplitz band)
# ---------------------------------------------------------------------------

def reference_forward(x, params, cfg, A, eps=1e-5):
    def ln(t, g, b, relu):
        m = jnp.mean(t, axis=(1, 3), keepdims=True)
        v = jnp.mean((t - m) ** 2, axis=(1, 3), keepdims=True)
        y = (t - m) / jnp.sqrt(v + eps)
        y = y * g[None, :, None, :] + b[None, :, None, :]
        return jnp.maximum(y, 0.0) if relu else y

    def conv1x1(t, w, b=None):
        y = jnp.einsum('nclv,oc->nolv', t, w)
        return y if b is None else y + b[None, :, None, None]

    N, _, L, V = x.shape
    P = A.shape[0]
    x = ln(x, params['ln_in_g'], params['ln_in_b'], relu=False)
    x = conv1x1(x, params['fcn_in_w'], params['fcn_in_b'])
    for i, lw in enumerate(params['layers']):
        cin, cout = cfg['in_ch'][i], cfg['out_ch'][i]
        stride, resflag = cfg['stride'][i], cfg['residual'][i]
        if resflag and cin == cout and stride == 1:
            res = x
        elif resflag:
            res = ln(conv1x1(x, lw['res_w']), lw['res_ln_g'], lw['res_ln_b'],
                     relu=False)
        else:
            res = None
        A_eff = A * lw['edge_importance']
        xc = conv1x1(x, lw['conv_w'], lw['conv_b'])               # (N, P*cout, L, V)
        xs = xc.reshape(N, P, cout, L, V)
        z = jnp.einsum('npclv,pvw->nclw', xs, A_eff)              # graph + p-sum
        taps = max(cfg['kernel'] // stride, 1)
        y = jnp.zeros_like(z)
        for t in range(taps):
            sh = t * stride
            if sh == 0:
                y = y + z
            else:
                y = y.at[:, :, sh:, :].add(z[:, :, :L - sh, :])
        y = ln(y, lw['ln_g'], lw['ln_b'], relu=True)
        x = y if res is None else jnp.maximum(y + res, 0.0)
    xm = jnp.mean(x, axis=-1)                                     # (N, C, L)
    return (jnp.einsum('ncl,kc->nkl', xm, params['fcn_out_w'])
            + params['fcn_out_b'][None, :, None])


# ---------------------------------------------------------------------------

if __name__ == "__main__":
    N, L, V, P = 2, 8, 16, 3
    cfg = dict(in_feat=4, num_classes=5, kernel=3, layers=2,
               in_ch=[8, 8], out_ch=[8, 16], stride=[1, 1],
               residual=[True, True], importance=True, dropout=[0.0, 0.0])

    key = jax.random.PRNGKey(0)
    k_x, k_A, k_p = jax.random.split(key, 3)

    x4 = jax.random.normal(k_x, (N, cfg['in_feat'], L, V), jnp.float32)
    A = jax.random.uniform(k_A, (P, V, V), jnp.float32)
    A = A / jnp.sum(A, axis=-1, keepdims=True)       # synthetic row-stochastic graph

    params = init_params(k_p, cfg, V, P)

    out = model_forward(x4.reshape(N, cfg['in_feat'], L * V), params, cfg, A, V)
    jax.block_until_ready(out)

    assert out.shape == (N, cfg['num_classes'], L), out.shape
    assert bool(jnp.all(jnp.isfinite(out)))

    ref = reference_forward(x4, params, cfg, A)
    assert bool(jnp.allclose(out, ref, atol=2e-3, rtol=2e-3)), float(
        jnp.max(jnp.abs(out - ref)))

    print("KERNEL_OK")
</pallas_src>

<mosaic_0001>
module attributes {stable_mosaic.version = 11 : i64} {
  func.func @_stem_kernel(%arg0: i32, %arg1: i32, %arg2: memref<1x4x128xf32, #tpu.memory_space<vmem>>, %arg3: memref<4x1x16xf32, #tpu.memory_space<vmem>>, %arg4: memref<4x1x16xf32, #tpu.memory_space<vmem>>, %arg5: memref<8x4xf32, #tpu.memory_space<vmem>>, %arg6: memref<8x1xf32, #tpu.memory_space<vmem>>, %arg7: memref<1x8x128xf32, #tpu.memory_space<vmem>>) attributes {dimension_semantics = [#tpu.dimension_semantics<parallel>, #tpu.dimension_semantics<parallel>], iteration_bounds = array<i64: 2, 1>, scalar_prefetch = 0 : i64, scratch_operands = 0 : i64, tpu.core_type = #tpu.core_type<tc>, window_params = [{transform_indices = @transform_0, window_bounds = array<i64: 1, 4, 128>}, {pipeline_mode = #tpu.pipeline_mode<synchronous>, transform_indices = @transform_1, window_bounds = array<i64: 4, 1, 16>}, {pipeline_mode = #tpu.pipeline_mode<synchronous>, transform_indices = @transform_2, window_bounds = array<i64: 4, 1, 16>}, {pipeline_mode = #tpu.pipeline_mode<synchronous>, transform_indices = @transform_3, window_bounds = array<i64: 8, 4>}, {pipeline_mode = #tpu.pipeline_mode<synchronous>, transform_indices = @transform_4, window_bounds = array<i64: 8, 1>}, {transform_indices = @transform_5, window_bounds = array<i64: 1, 8, 128>}]} {
    %c0 = arith.constant 0 : index
    %c0_0 = arith.constant 0 : index
    %c0_1 = arith.constant 0 : index
    %0 = vector.load %arg2[%c0, %c0_0, %c0_1] : memref<1x4x128xf32, #tpu.memory_space<vmem>>, vector<1x4x128xf32>
    %1 = vector.shape_cast %0 : vector<1x4x128xf32> to vector<4x128xf32>
    %2 = vector.shape_cast %1 : vector<4x128xf32> to vector<4x8x16xf32>
    %cst = arith.constant dense<0.000000e+00> : vector<4x8xf32>
    %3 = vector.multi_reduction <add>, %2, %cst [2] : vector<4x8x16xf32> to vector<4x8xf32>
    %4 = vector.shape_cast %3 : vector<4x8xf32> to vector<4x8x1xf32>
    %cst_2 = arith.constant 1.600000e+01 : f32
    %5 = vector.broadcast %cst_2 : f32 to vector<4x8x1xf32>
    %6 = arith.divf %4, %5 : vector<4x8x1xf32>
    %cst_3 = arith.constant dense<0.000000e+00> : vector<8x1xf32>
    %7 = vector.multi_reduction <add>, %6, %cst_3 [0] : vector<4x8x1xf32> to vector<8x1xf32>
    %8 = vector.shape_cast %7 : vector<8x1xf32> to vector<1x8x1xf32>
    %cst_4 = arith.constant 4.000000e+00 : f32
    %9 = vector.broadcast %cst_4 : f32 to vector<1x8x1xf32>
    %10 = arith.divf %8, %9 : vector<1x8x1xf32>
    %11 = vector.broadcast %10 : vector<1x8x1xf32> to vector<4x8x16xf32>
    %12 = arith.subf %2, %11 : vector<4x8x16xf32>
    %13 = arith.mulf %12, %12 : vector<4x8x16xf32>
    %cst_5 = arith.constant dense<0.000000e+00> : vector<4x8xf32>
    %14 = vector.multi_reduction <add>, %13, %cst_5 [2] : vector<4x8x16xf32> to vector<4x8xf32>
    %15 = vector.shape_cast %14 : vector<4x8xf32> to vector<4x8x1xf32>
    %cst_6 = arith.constant 1.600000e+01 : f32
    %16 = vector.broadcast %cst_6 : f32 to vector<4x8x1xf32>
    %17 = arith.divf %15, %16 : vector<4x8x1xf32>
    %cst_7 = arith.constant dense<0.000000e+00> : vector<8x1xf32>
    %18 = vector.multi_reduction <add>, %17, %cst_7 [0] : vector<4x8x1xf32> to vector<8x1xf32>
    %19 = vector.shape_cast %18 : vector<8x1xf32> to vector<1x8x1xf32>
    %cst_8 = arith.constant 4.000000e+00 : f32
    %20 = vector.broadcast %cst_8 : f32 to vector<1x8x1xf32>
    %21 = arith.divf %19, %20 : vector<1x8x1xf32>
    %cst_9 = arith.constant 9.99999974E-6 : f32
    %22 = vector.broadcast %cst_9 : f32 to vector<1x8x1xf32>
    %23 = arith.addf %21, %22 : vector<1x8x1xf32>
    %24 = math.rsqrt %23 : vector<1x8x1xf32>
    %25 = vector.broadcast %24 : vector<1x8x1xf32> to vector<4x8x16xf32>
    %26 = arith.mulf %12, %25 : vector<4x8x16xf32>
    %c0_10 = arith.constant 0 : index
    %c0_11 = arith.constant 0 : index
    %c0_12 = arith.constant 0 : index
    %27 = vector.load %arg3[%c0_10, %c0_11, %c0_12] : memref<4x1x16xf32, #tpu.memory_space<vmem>>, vector<4x1x16xf32>
    %28 = vector.broadcast %27 : vector<4x1x16xf32> to vector<4x8x16xf32>
    %29 = arith.mulf %26, %28 : vector<4x8x16xf32>
    %c0_13 = arith.constant 0 : index
    %c0_14 = arith.constant 0 : index
    %c0_15 = arith.constant 0 : index
    %30 = vector.load %arg4[%c0_13, %c0_14, %c0_15] : memref<4x1x16xf32, #tpu.memory_space<vmem>>, vector<4x1x16xf32>
    %31 = vector.broadcast %30 : vector<4x1x16xf32> to vector<4x8x16xf32>
    %32 = arith.addf %29, %31 : vector<4x8x16xf32>
    %c0_16 = arith.constant 0 : index
    %c0_17 = arith.constant 0 : index
    %33 = vector.load %arg5[%c0_16, %c0_17] : memref<8x4xf32, #tpu.memory_space<vmem>>, vector<8x4xf32>
    %34 = vector.shape_cast %32 : vector<4x8x16xf32> to vector<4x128xf32>
    %cst_18 = arith.constant dense<0.000000e+00> : vector<8x128xf32>
    %35 = tpu.matmul %33, %34, %cst_18 {dimension_numbers = #tpu.dot_dimension_numbers<[1], [0], [0], [1], [0, 0, 1, 1], [], []>} : vector<8x4xf32>, vector<4x128xf32>, vector<8x128xf32> -> vector<8x128xf32>
    %c0_19 = arith.constant 0 : index
    %c0_20 = arith.constant 0 : index
    %36 = vector.load %arg6[%c0_19, %c0_20] : memref<8x1xf32, #tpu.memory_space<vmem>>, vector<8x1xf32>
    %37 = vector.broadcast %36 : vector<8x1xf32> to vector<8x128xf32>
    %38 = arith.addf %35, %37 : vector<8x128xf32>
    %c0_21 = arith.constant 0 : index
    %c0_22 = arith.constant 0 : index
    %c0_23 = arith.constant 0 : index
    %39 = vector.load %arg7[%c0_21, %c0_22, %c0_23] : memref<1x8x128xf32, #tpu.memory_space<vmem>>, vector<1x8x128xf32>
    %40 = vector.shape_cast %39 : vector<1x8x128xf32> to vector<8x128xf32>
    %41 = vector.shape_cast %38 : vector<8x128xf32> to vector<1x8x128xf32>
    tpu.vector_store %arg7[%c0_21, %c0_22, %c0_23], %41 {strides = array<i32>} : memref<1x8x128xf32, #tpu.memory_space<vmem>>, vector<1x8x128xf32>,
    return
  }
  func.func @transform_0(%arg0: i32, %arg1: i32) -> (i32, i32, i32) {
    %c0_i32 = arith.constant 0 : i32
    %c0_i32_0 = arith.constant 0 : i32
    return %arg0, %c0_i32, %arg1 : i32, i32, i32
  }
  func.func @transform_1(%arg0: i32, %arg1: i32) -> (i32, i32, i32) {
    %c0_i32 = arith.constant 0 : i32
    %c0_i32_0 = arith.constant 0 : i32
    %c0_i32_1 = arith.constant 0 : i32
    %c0_i32_2 = arith.constant 0 : i32
    return %c0_i32, %c0_i32_0, %c0_i32_1 : i32, i32, i32
  }
  func.func @transform_2(%arg0: i32, %arg1: i32) -> (i32, i32, i32) {
    %c0_i32 = arith.constant 0 : i32
    %c0_i32_0 = arith.constant 0 : i32
    %c0_i32_1 = arith.constant 0 : i32
    %c0_i32_2 = arith.constant 0 : i32
    return %c0_i32, %c0_i32_0, %c0_i32_1 : i32, i32, i32
  }
  func.func @transform_3(%arg0: i32, %arg1: i32) -> (i32, i32) {
    %c0_i32 = arith.constant 0 : i32
    %c0_i32_0 = arith.constant 0 : i32
    %c0_i32_1 = arith.constant 0 : i32
    return %c0_i32, %c0_i32_0 : i32, i32
  }
  func.func @transform_4(%arg0: i32, %arg1: i32) -> (i32, i32) {
    %c0_i32 = arith.constant 0 : i32
    %c0_i32_0 = arith.constant 0 : i32
    %c0_i32_1 = arith.constant 0 : i32
    return %c0_i32, %c0_i32_0 : i32, i32
  }
  func.func @transform_5(%arg0: i32, %arg1: i32) -> (i32, i32, i32) {
    %c0_i32 = arith.constant 0 : i32
    %c0_i32_0 = arith.constant 0 : i32
    return %arg0, %c0_i32, %arg1 : i32, i32, i32
  }
}

</mosaic_0001>

<llo_original>
// kernel: tpu_custom_call.1
$region0: #{tpu_custom_call.1}
  #allocation0 [shape = 'u32[]', space=smem, size = 0x4, offset = 0x4, fixed_abs, tag = 'smem constant byte address 0x4 - core index']
  #allocation1 [shape = 'u32[144,128]{1,0:T(1,128)}', space=vmem, size = 0x12000, scoped, tag = 'internal scratch']
  %s0 = inlined_call_operand.vmem [shape: f32[2,4,128], index: 0, kind: input, shape index: {}]
  %s1 = inlined_call_operand.vmem [shape: f32[4,1,16], index: 1, kind: input, shape index: {}]
  %s2 = inlined_call_operand.vmem [shape: f32[4,1,16], index: 2, kind: input, shape index: {}]
  %s3 = inlined_call_operand.vmem [shape: f32[8,4], index: 3, kind: input, shape index: {}]
  %s4 = inlined_call_operand.vmem [shape: f32[8,1], index: 4, kind: input, shape index: {}]
  %s5 = inlined_call_operand.hbm [shape: f32[2,8,128], index: 5, kind: output, shape index: {}]
  %s6 = sld [smem:[#allocation0]]
  $region53: #{tpu_custom_call.1} parent=0
    _
  %s8 = ssub.s32 1, %s6
  %s9 = scalar_select 0, %s8, %s6
  $region1: #{tpu_custom_call.1} parent=0
    #allocation2 [shape = 'u8[8192]{0}', space=vmem, size = 0x2000, scoped, tag = 'output window, operand 0']
    #allocation3 [shape = 's32[2]{0}', space=sflag, size = 0x8, scoped, tag = 'scoped memory for tpu_custom_call.1']
    %10 = vsyncpa [#allocation3], 0
    %s11 = scalar_lea.sflag [#allocation3], 1
    %12 = vsyncpa %s11, 0
    loop: start=0, step=1, limit=4
    $region2: #{tpu_custom_call.1} parent=1 // loop_pre_header
      _
    $region3: #{tpu_custom_call.1} parent=1 // loop_header
      %s14 = sphi 0, %s18
      %p15 = scmp.ge.s32.totalorder %s14, 4
      %s21 = sphi 0, %s33
      %s22 = sphi 0, %s29
      %s23 = sphi 0, %s21
      %s24 = sphi 0, %s22
      %s25 = sphi 0, %s23
      %s26 = sphi 0, %s24
      %s38 = sphi 0, %s40
      %s41 = sphi 0, %s38
      %s42 = sphi 0, %s41
      %s58 = sphi 0, %s42
      %s62 = sphi 0, %s62
      %s64 = sphi 0, %s62
      %s65 = sphi 0, %s64
      %s79 = sphi 0, %s65
      %s83 = sphi 0, %s83
      %s85 = sphi 0, %s83
      %s86 = sphi 0, %s85
      %s100 = sphi 0, %s86
      %s104 = sphi 0, %s104
      %s106 = sphi 0, %s104
      %s107 = sphi 0, %s106
      %s121 = sphi 0, %s107
      %s125 = sphi 0, %s125
      %s127 = sphi 0, %s125
      %s128 = sphi 0, %s127
      %s142 = sphi 0, %s128
      %s150 = sphi 0, %s152
      %s153 = sphi 0, %s150
      %s154 = sphi 0, %s153
      %s170 = sphi 0, %s154
    $region4: #{tpu_custom_call.1} parent=1 // loop_header_branch
      %17 = sbr.rel (%p15) target = $region8
    $region5: #{tpu_custom_call.1} parent=1 // loop_body
      %s19 = ssub.s32 %s14, 1
      %s20 = ssub.s32 %s14, 2
      %s27 = sadd.s32 1, %s22
      %p28 = scmp.ge.s32.totalorder %s27, 1
      %s29 = scalar_select %p28, 0, %s27
      %s30 = sadd.s32 1, %s21
      %s31 = scalar_select %p28, %s30, %s21
      %p32 = scmp.ge.s32.totalorder %s31, 2
      %s33 = scalar_select %p32, 0, %s31
      %s34 = ssub.s32 %s21, %s33
      %s35 = ssub.s32 %s22, %s29
      %s36 = sor.u32 %s34, %s35
      %p37 = scmp.eq.s32.totalorder %s36, 0
      %s39 = sadd.s32 %s38, 1
      %s40 = scalar_select %p37, %s38, %s39
      %p43 = pneg %p37
      %p44 = scmp.eq.s32.totalorder %s14, 1
      %p45 = por %p43, %p44
      %p46 = scmp.ne.s32.totalorder %s38, %s41
      %p47 = scmp.eq.s32.totalorder %s14, 0
      %p48 = por %p46, %p47
      %p49 = scmp.ne.s32.totalorder %s38, %s41
      %p50 = scmp.eq.s32.totalorder %s19, 1
      %p51 = por %p49, %p50
      %p52 = scmp.ne.s32.totalorder %s41, %s42
      %p53 = scmp.eq.s32.totalorder %s19, 0
      %p54 = por %p52, %p53
      %p55 = scmp.ne.s32.totalorder %s41, %s42
      %p56 = scmp.eq.s32.totalorder %s20, 1
      %p57 = por %p55, %p56
      %p59 = scmp.ne.s32.totalorder %s42, %s58
      %p60 = scmp.eq.s32.totalorder %s20, 0
      %p61 = por %p59, %p60
      %s63 = sadd.s32 %s62, 1
      %p66 = scmp.eq.s32.totalorder %s14, 1
      %p67 = scmp.ne.s32.totalorder %s62, %s64
      %p68 = scmp.eq.s32.totalorder %s14, 0
      %p69 = por %p67, %p68
      %p70 = scmp.ne.s32.totalorder %s62, %s64
      %p71 = scmp.eq.s32.totalorder %s19, 1
      %p72 = por %p70, %p71
      %p73 = scmp.ne.s32.totalorder %s64, %s65
      %p74 = scmp.eq.s32.totalorder %s19, 0
      %p75 = por %p73, %p74
      %p76 = scmp.ne.s32.totalorder %s64, %s65
      %p77 = scmp.eq.s32.totalorder %s20, 1
      %p78 = por %p76, %p77
      %p80 = scmp.ne.s32.totalorder %s65, %s79
      %p81 = scmp.eq.s32.totalorder %s20, 0
      %p82 = por %p80, %p81
      %s84 = sadd.s32 %s83, 1
      %p87 = scmp.eq.s32.totalorder %s14, 1
      %p88 = scmp.ne.s32.totalorder %s83, %s85
      %p89 = scmp.eq.s32.totalorder %s14, 0
      %p90 = por %p88, %p89
      %p91 = scmp.ne.s32.totalorder %s83, %s85
      %p92 = scmp.eq.s32.totalorder %s19, 1
      %p93 = por %p91, %p92
      %p94 = scmp.ne.s32.totalorder %s85, %s86
      %p95 = scmp.eq.s32.totalorder %s19, 0
      %p96 = por %p94, %p95
      %p97 = scmp.ne.s32.totalorder %s85, %s86
      %p98 = scmp.eq.s32.totalorder %s20, 1
      %p99 = por %p97, %p98
      %p101 = scmp.ne.s32.totalorder %s86, %s100
      %p102 = scmp.eq.s32.totalorder %s20, 0
      %p103 = por %p101, %p102
      %s105 = sadd.s32 %s104, 1
      %p108 = scmp.eq.s32.totalorder %s14, 1
      %p109 = scmp.ne.s32.totalorder %s104, %s106
      %p110 = scmp.eq.s32.totalorder %s14, 0
      %p111 = por %p109, %p110
      %p112 = scmp.ne.s32.totalorder %s104, %s106
      %p113 = scmp.eq.s32.totalorder %s19, 1
      %p114 = por %p112, %p113
      %p115 = scmp.ne.s32.totalorder %s106, %s107
      %p116 = scmp.eq.s32.totalorder %s19, 0
      %p117 = por %p115, %p116
      %p118 = scmp.ne.s32.totalorder %s106, %s107
      %p119 = scmp.eq.s32.totalorder %s20, 1
      %p120 = por %p118, %p119
      %p122 = scmp.ne.s32.totalorder %s107, %s121
      %p123 = scmp.eq.s32.totalorder %s20, 0
      %p124 = por %p122, %p123
      %s126 = sadd.s32 %s125, 1
      %p129 = scmp.eq.s32.totalorder %s14, 1
      %p130 = scmp.ne.s32.totalorder %s125, %s127
      %p131 = scmp.eq.s32.totalorder %s14, 0
      %p132 = por %p130, %p131
      %p133 = scmp.ne.s32.totalorder %s125, %s127
      %p134 = scmp.eq.s32.totalorder %s19, 1
      %p135 = por %p133, %p134
      %p136 = scmp.ne.s32.totalorder %s127, %s128
      %p137 = scmp.eq.s32.totalorder %s19, 0
      %p138 = por %p136, %p137
      %p139 = scmp.ne.s32.totalorder %s127, %s128
      %p140 = scmp.eq.s32.totalorder %s20, 1
      %p141 = por %p139, %p140
      %p143 = scmp.ne.s32.totalorder %s128, %s142
      %p144 = scmp.eq.s32.totalorder %s20, 0
      %p145 = por %p143, %p144
      %s146 = ssub.s32 %s21, %s33
      %s147 = ssub.s32 %s22, %s29
      %s148 = sor.u32 %s146, %s147
      %p149 = scmp.eq.s32.totalorder %s148, 0
      %s151 = sadd.s32 %s150, 1
      %s152 = scalar_select %p149, %s150, %s151
      %p155 = pneg %p149
      %p156 = scmp.eq.s32.totalorder %s14, 1
      %p157 = por %p155, %p156
      %p158 = scmp.ne.s32.totalorder %s150, %s153
      %p159 = scmp.eq.s32.totalorder %s14, 0
      %p160 = por %p158, %p159
      %p161 = scmp.ne.s32.totalorder %s150, %s153
      %p162 = scmp.eq.s32.totalorder %s19, 1
      %p163 = por %p161, %p162
      %p164 = scmp.ne.s32.totalorder %s153, %s154
      %p165 = scmp.eq.s32.totalorder %s19, 0
      %p166 = por %p164, %p165
      %p167 = scmp.ne.s32.totalorder %s153, %s154
      %p168 = scmp.eq.s32.totalorder %s20, 1
      %p169 = por %p167, %p168
      %p171 = scmp.ne.s32.totalorder %s154, %s170
      %p172 = scmp.eq.s32.totalorder %s20, 0
      %p173 = por %p171, %p172
      %p174 = scmp.le.s32.totalorder 1, %s14
      %p175 = scmp.lt.s32.totalorder %s14, 3
      %p176 = pnand %p174, %p175
      %p177 = pneg %p176
      // Predicated region
      $region9: #{tpu_custom_call.1} parent=5 // pred_check
        _
      $region10: #{tpu_custom_call.1} parent=5 // pred_check_branch
        %179 = sbr.rel (%p176) target = $region12
      $region11: #{tpu_custom_call.1} parent=5 // pred_region
        %s180 = ssub.s32 %s14, 1
        // Predicated region
        $region13: #{tpu_custom_call.1} parent=11 // pred_check
          %p181 = pneg %p75
        $region14: #{tpu_custom_call.1} parent=11 // pred_check_branch
          %183 = sbr.rel (%p181) target = $region16
        $region15: #{tpu_custom_call.1} parent=11 // pred_region
          _
        $region16: #{tpu_custom_call.1} parent=11 // pred_fallthru
          _
        // Predicated region
        $region17: #{tpu_custom_call.1} parent=11 // pred_check
          %p184 = pneg %p96
        $region18: #{tpu_custom_call.1} parent=11 // pred_check_branch
          %186 = sbr.rel (%p184) target = $region20
        $region19: #{tpu_custom_call.1} parent=11 // pred_region
          _
        $region20: #{tpu_custom_call.1} parent=11 // pred_fallthru
          _
        // Predicated region
        $region21: #{tpu_custom_call.1} parent=11 // pred_check
          %p187 = pneg %p117
        $region22: #{tpu_custom_call.1} parent=11 // pred_check_branch
          %189 = sbr.rel (%p187) target = $region24
        $region23: #{tpu_custom_call.1} parent=11 // pred_region
          _
        $region24: #{tpu_custom_call.1} parent=11 // pred_fallthru
          _
        // Predicated region
        $region25: #{tpu_custom_call.1} parent=11 // pred_check
          %p190 = pneg %p138
        $region26: #{tpu_custom_call.1} parent=11 // pred_check_branch
          %192 = sbr.rel (%p190) target = $region28
        $region27: #{tpu_custom_call.1} parent=11 // pred_region
          _
        $region28: #{tpu_custom_call.1} parent=11 // pred_fallthru
          _
      $region12: #{tpu_custom_call.1} parent=5 // pred_fallthru
        _
      %p193 = scmp.lt.s32.totalorder %s14, 2
      // Predicated region
      $region29: #{tpu_custom_call.1} parent=5 // pred_check
        %p194 = pneg %p193
      $region30: #{tpu_custom_call.1} parent=5 // pred_check_branch
        %196 = sbr.rel (%p194) target = $region32
      $region31: #{tpu_custom_call.1} parent=5 // pred_region
        // Predicated region
        $region33: #{tpu_custom_call.1} parent=31 // pred_check
          %p197 = pneg %p48
        $region34: #{tpu_custom_call.1} parent=31 // pred_check_branch
          %199 = sbr.rel (%p197) target = $region36
        $region35: #{tpu_custom_call.1} parent=31 // pred_region
          %p200 = scmp.lt.s32.totalorder %s21, 1
          %s201 = scalar_select %p200, %s21, 1
          %p202 = scmp.lt.s32.totalorder %s22, 0
          %s203 = scalar_select %p202, %s22, 0
          %s204 = sadd.s32 %s203, %s201
          %s205 = smul.addr %s204, 4
          %s206 = scalar_lea.vmem %s0, %s205
        $region36: #{tpu_custom_call.1} parent=31 // pred_fallthru
          _
      $region32: #{tpu_custom_call.1} parent=5 // pred_fallthru
        _
      %p207 = scmp.le.s32.totalorder 1, %s14
      %p208 = scmp.lt.s32.totalorder %s14, 3
      %p209 = pnand %p207, %p208
      %p210 = pneg %p209
      // Predicated region
      $region37: #{tpu_custom_call.1} parent=5 // pred_check
        _
      $region38: #{tpu_custom_call.1} parent=5 // pred_check_branch
        %212 = sbr.rel (%p209) target = $region40
      $region39: #{tpu_custom_call.1} parent=5 // pred_region
        %s213 = ssub.s32 %s14, 1
        %p214 = scmp.lt.s32.totalorder %s23, 1
        %s215 = scalar_select %p214, %s23, 1
        %p216 = scmp.lt.s32.totalorder %s24, 0
        %s217 = scalar_select %p216, %s24, 0
        %s218 = sadd.s32 %s217, %s215
        %s219 = smul.addr %s218, 4
        %s220 = scalar_lea.vmem %s0, %s219
        %p221 = pneg %p54
        %p222 = pneg %p51
        %p223 = pneg %p75
        %p224 = pneg %p72
        %p225 = pneg %p96
        %p226 = pneg %p93
        %p227 = pneg %p117
        %p228 = pneg %p114
        %p229 = pneg %p138
        %p230 = pneg %p135
        %p231 = pneg %p166
        %p232 = pneg %p163
        %s233 = sand.u32 %s153, 1
        %s234 = scalar_lea.sflag [#allocation3], %s233
        %s235 = sand.u32 %s153, 1
        %s236 = smul.addr %s235, 8
        %s237 = scalar_lea.vmem [#allocation2], %s236
        %p238 = scmp.lt.s32.totalorder %s23, 1
        %s239 = scalar_select %p238, %s23, 1
        %p240 = scmp.lt.s32.totalorder %s24, 0
        %s241 = scalar_select %p240, %s24, 0
        %s242 = sadd.s32 %s241, %s239
        %s243 = smul.addr %s242, 4
        %s244 = scalar_lea.vmem %s0, %s243
        %v245 = vld [vmem:[%s244] sm:$0xf]
        %247 = vrot.lane.b32.xlu0 %v245, 112
        %v248 = vpop.permute.xlu0 %247
        %250 = vrot.lane.b32.xlu0 %v245, 96
        %v251 = vpop.permute.xlu0 %250
        %253 = vrot.lane.b32.xlu0 %v245, 80
        %v254 = vpop.permute.xlu0 %253
        %256 = vrot.lane.b32.xlu0 %v245, 64
        %v257 = vpop.permute.xlu0 %256
        %259 = vrot.lane.b32.xlu0 %v245, 48
        %v260 = vpop.permute.xlu0 %259
        %262 = vrot.lane.b32.xlu0 %v245, 32
        %v263 = vpop.permute.xlu0 %262
        %265 = vrot.lane.b32.xlu0 %v245, 16
        %v266 = vpop.permute.xlu0 %265
        %v268 = vcombine.low %v245, %v251
        %v270 = vunpack.c.l.s4 1983009808
        %v271 = vunpack.c.0.s8 %v270
        %v272 = vlaneseq
        %v273 = vshrl.u32 %v272, 7
        %v274 = vsub.s32 %v271, %v273
        %v275 = vrot.slane %v268, %v274
        %v276 = vcombine.low %v248, %v254
        %v278 = vunpack.c.l.s4 1983009808
        %v279 = vunpack.c.0.s8 %v278
        %v280 = vlaneseq
        %v281 = vshrl.u32 %v280, 7
        %v282 = vsub.s32 %v279, %v281
        %v283 = vrot.slane %v276, %v282
        %v284 = vcombine.low %v257, %v263
        %v286 = vunpack.c.l.s4 1983009808
        %v287 = vunpack.c.0.s8 %v286
        %v288 = vlaneseq
        %v289 = vshrl.u32 %v288, 7
        %v290 = vsub.s32 %v287, %v289
        %v291 = vrot.slane %v284, %v290
        %v292 = vcombine.low %v260, %v266
        %v294 = vunpack.c.l.s4 1983009808
        %v295 = vunpack.c.0.s8 %v294
        %v296 = vlaneseq
        %v297 = vshrl.u32 %v296, 7
        %v298 = vsub.s32 %v295, %v297
        %v299 = vrot.slane %v292, %v298
        %v300 = vcombine.low %v275, %v283
        %v301 = vcombine.high %v275, %v283
        %v303 = vunpack.c.l.s4 1934713408
        %v304 = vunpack.c.0.s8 %v303
        %v305 = vlaneseq
        %v306 = vshrl.u32 %v305, 7
        %v307 = vsub.s32 %v304, %v306
        %v308 = vrot.slane %v300, %v307
        %v310 = vunpack.c.l.s4 1934713408
        %v311 = vunpack.c.0.s8 %v310
        %v312 = vlaneseq
        %v313 = vshrl.u32 %v312, 7
        %v314 = vsub.s32 %v311, %v313
        %v315 = vrot.slane %v301, %v314
        %v316 = vcombine.low %v291, %v299
        %v317 = vcombine.high %v291, %v299
        %v319 = vunpack.c.l.s4 1934713408
        %v320 = vunpack.c.0.s8 %v319
        %v321 = vlaneseq
        %v322 = vshrl.u32 %v321, 7
        %v323 = vsub.s32 %v320, %v322
        %v324 = vrot.slane %v316, %v323
        %v326 = vunpack.c.l.s4 1934713408
        %v327 = vunpack.c.0.s8 %v326
        %v328 = vlaneseq
        %v329 = vshrl.u32 %v328, 7
        %v330 = vsub.s32 %v327, %v329
        %v331 = vrot.slane %v317, %v330
        %v332 = vcombine.low %v308, %v324
        %v333 = vcombine.high %v308, %v324
        %v334 = vcombine.low %v315, %v331
        %v335 = vcombine.high %v315, %v331
        %vm336 = vcmask 130048
        %v337 = vsel %vm336, %v332, 0.0
        %338 = vadd.xlane.f32.xlu0 %v337
        %v339 = vpop.xlane.xlu0 %338
        %v340 = vsel %vm336, %v333, 0.0
        %341 = vadd.xlane.f32.xlu0 %v340
        %v342 = vpop.xlane.xlu0 %341
        %v343 = vsel %vm336, %v334, 0.0
        %344 = vadd.xlane.f32.xlu0 %v343
        %v345 = vpop.xlane.xlu0 %344
        %v346 = vsel %vm336, %v335, 0.0
        %347 = vadd.xlane.f32.xlu0 %v346
        %v348 = vpop.xlane.xlu0 %347
        %v349 = vrcp.pop 16.0
        %v350 = vmul.f32 %v339, %v349
        %v351 = vmul.f32 %v342, %v349
        %v352 = vmul.f32 %v345, %v349
        %v353 = vmul.f32 %v348, %v349
        %v354 = vadd.f32 %v350, %v351
        %v355 = vadd.f32 %v354, %v352
        %v356 = vadd.f32 %v355, %v353
        %v357 = vrcp.pop 4.0
        %v358 = vmul.f32 %v356, %v357
        %v359 = vsub.f32 %v332, %v358
        %v360 = vsub.f32 %v333, %v358
        %v361 = vsub.f32 %v334, %v358
        %v362 = vsub.f32 %v335, %v358
        %v363 = vmul.f32 %v359, %v359
        %v364 = vmul.f32 %v360, %v360
        %v365 = vmul.f32 %v361, %v361
        %v366 = vmul.f32 %v362, %v362
        %v367 = vsel %vm336, %v363, 0.0
        %368 = vadd.xlane.f32.xlu0 %v367
        %v369 = vpop.xlane.xlu0 %368
        %v370 = vsel %vm336, %v364, 0.0
        %371 = vadd.xlane.f32.xlu0 %v370
        %v372 = vpop.xlane.xlu0 %371
        %v373 = vsel %vm336, %v365, 0.0
        %374 = vadd.xlane.f32.xlu0 %v373
        %v375 = vpop.xlane.xlu0 %374
        %v376 = vsel %vm336, %v366, 0.0
        %377 = vadd.xlane.f32.xlu0 %v376
        %v378 = vpop.xlane.xlu0 %377
        %v379 = vmul.f32 %v369, %v349
        %v380 = vmul.f32 %v372, %v349
        %v381 = vmul.f32 %v375, %v349
        %v382 = vmul.f32 %v378, %v349
        %v383 = vadd.f32 %v379, %v380
        %v384 = vadd.f32 %v383, %v381
        %v385 = vadd.f32 %v384, %v382
        %v386 = vmul.f32 %v385, %v357
        %v387 = vadd.f32 %v386, 1e-05
        %v388 = vrsqrt.pop %v387
        %v389 = vmul.f32 %v359, %v388
        %v390 = vmul.f32 %v360, %v388
        %v391 = vmul.f32 %v361, %v388
        %v392 = vmul.f32 %v362, %v388
        %v393 = vld [vmem:[%s1] sm:$0x1]
        %v394 = vld [vmem:[%s1 + $0x1] sm:$0x1]
        %v395 = vld [vmem:[%s1 + $0x2] sm:$0x1]
        %v396 = vld [vmem:[%s1 + $0x3] sm:$0x1]
        %v401 = vlaneseq
        %v402 = vshrl.u32 %v401, 7
        %v403 = vsub.s32 0, %v402
        %v404 = vrot.slane %v393, %v403
        %v405 = vlaneseq
        %v406 = vshrl.u32 %v405, 7
        %v407 = vsub.s32 0, %v406
        %v408 = vrot.slane %v394, %v407
        %v409 = vlaneseq
        %v410 = vshrl.u32 %v409, 7
        %v411 = vsub.s32 0, %v410
        %v412 = vrot.slane %v395, %v411
        %v413 = vlaneseq
        %v414 = vshrl.u32 %v413, 7
        %v415 = vsub.s32 0, %v414
        %v416 = vrot.slane %v396, %v415
        %v421 = vmul.f32 %v389, %v404
        %v422 = vmul.f32 %v390, %v408
        %v423 = vmul.f32 %v391, %v412
        %v424 = vmul.f32 %v392, %v416
        %v425 = vld [vmem:[%s2] sm:$0x1]
        %v426 = vld [vmem:[%s2 + $0x1] sm:$0x1]
        %v427 = vld [vmem:[%s2 + $0x2] sm:$0x1]
        %v428 = vld [vmem:[%s2 + $0x3] sm:$0x1]
        %v433 = vlaneseq
        %v434 = vshrl.u32 %v433, 7
        %v435 = vsub.s32 0, %v434
        %v436 = vrot.slane %v425, %v435
        %v437 = vlaneseq
        %v438 = vshrl.u32 %v437, 7
        %v439 = vsub.s32 0, %v438
        %v440 = vrot.slane %v426, %v439
        %v441 = vlaneseq
        %v442 = vshrl.u32 %v441, 7
        %v443 = vsub.s32 0, %v442
        %v444 = vrot.slane %v427, %v443
        %v445 = vlaneseq
        %v446 = vshrl.u32 %v445, 7
        %v447 = vsub.s32 0, %v446
        %v448 = vrot.slane %v428, %v447
        %v453 = vadd.f32 %v421, %v436
        %v454 = vadd.f32 %v422, %v440
        %v455 = vadd.f32 %v423, %v444
        %v456 = vadd.f32 %v424, %v448
        %v457 = vld [vmem:[%s3] sm:$0xff]
        %v458 = vcombine.low %v453, %v455
        %v459 = vcombine.high %v453, %v455
        %v461 = vunpack.c.l.s4 1983009808
        %v462 = vunpack.c.0.s8 %v461
        %v463 = vlaneseq
        %v464 = vshrl.u32 %v463, 7
        %v465 = vsub.s32 %v462, %v464
        %v466 = vrot.slane %v458, %v465
        %v468 = vunpack.c.l.s4 1983009808
        %v469 = vunpack.c.0.s8 %v468
        %v470 = vlaneseq
        %v471 = vshrl.u32 %v470, 7
        %v472 = vsub.s32 %v469, %v471
        %v473 = vrot.slane %v459, %v472
        %v474 = vcombine.low %v454, %v456
        %v475 = vcombine.high %v454, %v456
        %v477 = vunpack.c.l.s4 1983009808
        %v478 = vunpack.c.0.s8 %v477
        %v479 = vlaneseq
        %v480 = vshrl.u32 %v479, 7
        %v481 = vsub.s32 %v478, %v480
        %v482 = vrot.slane %v474, %v481
        %v484 = vunpack.c.l.s4 1983009808
        %v485 = vunpack.c.0.s8 %v484
        %v486 = vlaneseq
        %v487 = vshrl.u32 %v486, 7
        %v488 = vsub.s32 %v485, %v487
        %v489 = vrot.slane %v475, %v488
        %v490 = vcombine.low %v466, %v482
        %v491 = vcombine.high %v466, %v482
        %v493 = vunpack.c.l.s4 1934713408
        %v494 = vunpack.c.0.s8 %v493
        %v495 = vlaneseq
        %v496 = vshrl.u32 %v495, 7
        %v497 = vsub.s32 %v494, %v496
        %v498 = vrot.slane %v490, %v497
        %v500 = vunpack.c.l.s4 1934713408
        %v501 = vunpack.c.0.s8 %v500
        %v502 = vlaneseq
        %v503 = vshrl.u32 %v502, 7
        %v504 = vsub.s32 %v501, %v503
        %v505 = vrot.slane %v491, %v504
        %v506 = vcombine.low %v473, %v489
        %v507 = vcombine.high %v473, %v489
        %v509 = vunpack.c.l.s4 1934713408
        %v510 = vunpack.c.0.s8 %v509
        %v511 = vlaneseq
        %v512 = vshrl.u32 %v511, 7
        %v513 = vsub.s32 %v510, %v512
        %v514 = vrot.slane %v506, %v513
        %v516 = vunpack.c.l.s4 1934713408
        %v517 = vunpack.c.0.s8 %v516
        %v518 = vlaneseq
        %v519 = vshrl.u32 %v518, 7
        %v520 = vsub.s32 %v517, %v519
        %v521 = vrot.slane %v507, %v520
        %v522 = vcombine.high %v498, 0.0
        %v523 = vcombine.high %v505, 0.0
        %v524 = vcombine.high %v514, 0.0
        %v525 = vcombine.high %v521, 0.0
        %527 = vrot.lane.b32.xlu0 %v522, 16
        %v528 = vpop.permute.xlu0 %527
        %531 = vrot.lane.b32.xlu0 %v505, 32
        %v532 = vpop.permute.xlu0 %531
        %535 = vrot.lane.b32.xlu0 %v523, 48
        %v536 = vpop.permute.xlu0 %535
        %539 = vrot.lane.b32.xlu0 %v514, 64
        %v540 = vpop.permute.xlu0 %539
        %543 = vrot.lane.b32.xlu0 %v524, 80
        %v544 = vpop.permute.xlu0 %543
        %547 = vrot.lane.b32.xlu0 %v521, 96
        %v548 = vpop.permute.xlu0 %547
        %551 = vrot.lane.b32.xlu0 %v525, 112
        %v552 = vpop.permute.xlu0 %551
        %v554 = vsel %vm336, %v498, %v528
        %vm555 = vcmask 261120
        %v556 = vsel %vm555, %v554, %v532
        %vm557 = vcmask 392192
        %v558 = vsel %vm557, %v556, %v536
        %vm559 = vcmask 523264
        %v560 = vsel %vm559, %v558, %v540
        %vm561 = vcmask 654336
        %v562 = vsel %vm561, %v560, %v544
        %vm563 = vcmask 785408
        %v564 = vsel %vm563, %v562, %v548
        %vm565 = vcmask 916480
        %v566 = vsel %vm565, %v564, %v552
        %v567 = vld [vmem:[%s4] sm:$0xff]
        %569 = vset.pattern.permute.xlu0 0
        %570 = vperm.xlu0 %569, %v567
        %v571 = vpop.permute.xlu0 %570
        %vm573 = vcmask 31744
        %v575 = vsel %vm573, %v457, 0
        %vm577 = vcmask 1043456
        %v579 = vsel %vm577, %v566, 0
        %581 = vmatprep.subr.mxu0 0.0
        %582 = vmatpush1.msra.mxu0 %v579
        %583 = vmatprep.subr.mxu0 0.0
        %584 = vmatpush1.msra.mxu0 0.0
        %585 = vmatprep.subr.mxu0 0.0
        %586 = vmatpush1.msra.mxu0 0.0
        %587 = vmatprep.subr.mxu0 0.0
        %588 = vmatpush1.msra.mxu0 0.0
        %589 = vmatprep.subr.mxu0 0.0
        %590 = vmatpush1.msra.mxu0 0.0
        %591 = vmatprep.subr.mxu0 0.0
        %592 = vmatpush1.msra.mxu0 0.0
        %593 = vmatprep.subr.mxu0 0.0
        %594 = vmatpush1.msra.mxu0 0.0
        %595 = vmatprep.subr.mxu0 0.0
        %596 = vmatpush1.msra.mxu0 0.0
        %597 = vmatprep.subr.mxu0 0.0
        %598 = vmatpush1.msra.mxu0 0.0
        %599 = vmatprep.subr.mxu0 0.0
        %600 = vmatpush1.msra.mxu0 0.0
        %601 = vmatprep.subr.mxu0 0.0
        %602 = vmatpush1.msra.mxu0 0.0
        %603 = vmatprep.subr.mxu0 0.0
        %604 = vmatpush1.msra.mxu0 0.0
        %605 = vmatprep.subr.mxu0 0.0
        %606 = vmatpush1.msra.mxu0 0.0
        %607 = vmatprep.subr.mxu0 0.0
        %608 = vmatpush1.msra.mxu0 0.0
        %609 = vmatprep.subr.mxu0 0.0
        %610 = vmatpush1.msra.mxu0 0.0
        %611 = vmatprep.subr.mxu0 0.0
        %612 = vmatpush1.msra.mxu0 0.0
        %613 = vmatprep.subr.mxu0 0.0
        %614 = vmatpush1.msra.mxu0 0.0
        %615 = vmatprep.subr.mxu0 0.0
        %616 = vmatpush1.msra.mxu0 0.0
        %617 = vmatprep.subr.mxu0 0.0
        %618 = vmatpush1.msra.mxu0 0.0
        %619 = vmatprep.subr.mxu0 0.0
        %620 = vmatpush1.msra.mxu0 0.0
        %621 = vmatprep.subr.mxu0 0.0
        %622 = vmatpush1.msra.mxu0 0.0
        %623 = vmatprep.subr.mxu0 0.0
        %624 = vmatpush1.msra.mxu0 0.0
        %625 = vmatprep.subr.mxu0 0.0
        %626 = vmatpush1.msra.mxu0 0.0
        %627 = vmatprep.subr.mxu0 0.0
        %628 = vmatpush1.msra.mxu0 0.0
        %629 = vmatprep.subr.mxu0 0.0
        %630 = vmatpush1.msra.mxu0 0.0
        %631 = vmatprep.subr.mxu0 0.0
        %632 = vmatpush1.msra.mxu0 0.0
        %633 = vmatprep.subr.mxu0 0.0
        %634 = vmatpush1.msra.mxu0 0.0
        %635 = vmatprep.subr.mxu0 0.0
        %636 = vmatpush1.msra.mxu0 0.0
        %637 = vmatprep.subr.mxu0 0.0
        %638 = vmatpush1.msra.mxu0 0.0
        %639 = vmatprep.subr.mxu0 0.0
        %640 = vmatpush1.msra.mxu0 0.0
        %641 = vmatprep.subr.mxu0 0.0
        %642 = vmatpush1.msra.mxu0 0.0
        %643 = vmatprep.subr.mxu0 0.0
        %644 = vmatpush1.msra.mxu0 0.0
        %645 = vmatprep.mubr.f32.mxu0 0.0
        %646 = vmatmul.mubr.f32.gmra.mrb[0].mxu0 %v575
        %v647 = vpop.f32.mrb[0].mxu0
        %v648 = vadd.f32 %v571, %v647
        %v649 = vpop.f32.mrb[0].mxu0
        %650 = vdwg.mxu0
        %651 = vst [vmem:[%s237] sm:$0xff] %v648
        %s652 = sand.u32 %s153, 1
        %s653 = scalar_lea.sflag [#allocation3], %s652
        %s654 = sand.u32 %s153, 1
        %s655 = smul.addr %s654, 8
        %s656 = scalar_lea.vmem [#allocation2], %s655
        // Predicated region
        $region41: #{tpu_custom_call.1} parent=39 // pred_check
          %p657 = pneg %p163
        $region42: #{tpu_custom_call.1} parent=39 // pred_check_branch
          %659 = sbr.rel (%p657) target = $region44
        $region43: #{tpu_custom_call.1} parent=39 // pred_region
          %s661 = ssub.s32 128, 128
          %662 = vsyncadd %s653, %s661
          %s663 = sadd.s32 %s24, %s23
          %s664 = smul.addr %s663, 128
          %s665 = scalar_lea.hbm %s5, %s664
          %s667 = sshll.u32 %s656, 4
          %s668 = int_to_ptr.vmem [resolvable:$true] %s667
          %670 = dma.vmem_to_hbm [thread:$0]  %s668, 128, %s665, %s653
        $region44: #{tpu_custom_call.1} parent=39 // pred_fallthru
          _
      $region40: #{tpu_custom_call.1} parent=5 // pred_fallthru
        _
      %p671 = scmp.le.s32.totalorder 2, %s14
      // Predicated region
      $region45: #{tpu_custom_call.1} parent=5 // pred_check
        %p672 = pneg %p671
      $region46: #{tpu_custom_call.1} parent=5 // pred_check_branch
        %674 = sbr.rel (%p672) target = $region48
      $region47: #{tpu_custom_call.1} parent=5 // pred_region
        %s675 = ssub.s32 %s14, 2
        // Predicated region
        $region49: #{tpu_custom_call.1} parent=47 // pred_check
          %p676 = pneg %p169
        $region50: #{tpu_custom_call.1} parent=47 // pred_check_branch
          %678 = sbr.rel (%p676) target = $region52
        $region51: #{tpu_custom_call.1} parent=47 // pred_region
          %s679 = sand.u32 %s154, 1
          %s680 = scalar_lea.sflag [#allocation3], %s679
          %s681 = sand.u32 %s154, 1
          %s682 = smul.addr %s681, 8
          %s683 = scalar_lea.vmem [#allocation2], %s682
          %684 = dma.done %s680, 128
        $region52: #{tpu_custom_call.1} parent=47 // pred_fallthru
          _
      $region48: #{tpu_custom_call.1} parent=5 // pred_fallthru
        _
    $region6: #{tpu_custom_call.1} parent=1 // loop_footer
      %s18 = sadd.s32 1, %s14
    $region7: #{tpu_custom_call.1} parent=1 // loop_footer_branch
      %13 = sbr.rel target = $region3
    $region8: #{tpu_custom_call.1} parent=1 // loop_exit
      _
    %685 = vsyncpa [#allocation3], 1
    %s686 = scalar_lea.sflag [#allocation3], 1
    %687 = vsyncpa %s686, 1

</llo_original>
